<compile_context>
chip_gen: v5e
topology: v5e:2x2
jax: 0.10.0
libtpu: 0.0.40
codegen_flags: <defaults>
</compile_context>

<pallas_src>
import functools

import jax
import jax.numpy as jnp
from jax.experimental import pallas as pl
from jax.experimental.pallas import tpu as pltpu


def _round_up(x, m):
    return ((x + m - 1) // m) * m


def _pick_lane_tile(extent, max_tile=1024, align=128):
    """Largest lane tile <= max_tile, preferring a divisor of `extent` that is a
    multiple of `align` (so no lane mask and no masked partial-tile stores)."""
    if extent <= max_tile:
        return extent
    for cand in range(max_tile, align - 1, -align):
        if extent % cand == 0:
            return cand
    return max_tile  # no aligned divisor: last tile is masked


# ---------------------------------------------------------------------------
# Fused single-call path (whole activation resident in VMEM).
# ---------------------------------------------------------------------------
def _fused_bn_kernel(x_ref, gamma_ref, beta_ref, o_ref, *, eps, inv_m):
    """BatchNorm2d (training-mode stats) on a VMEM-resident (N, C, HW) block."""
    x = x_ref[...].astype(jnp.float32)                    # (N, C, HW)
    # Two-pass mean/variance: avoids the E[x^2]-mean^2 cancellation and costs
    # nothing extra in HBM traffic since x is already in VMEM.
    s = jnp.sum(x, axis=2, keepdims=True)                 # (N, C, 1) lane reduce
    mean = jnp.sum(s, axis=0, keepdims=True) * inv_m      # (1, C, 1)
    d = x - mean
    v = jnp.sum(d * d, axis=2, keepdims=True)             # (N, C, 1)
    var = jnp.sum(v, axis=0, keepdims=True) * inv_m       # (1, C, 1) biased var
    inv = jax.lax.rsqrt(var + jnp.float32(eps))
    scale = gamma_ref[...].astype(jnp.float32) * inv      # (1, C, 1)
    shift = beta_ref[...].astype(jnp.float32) - mean * scale
    o_ref[...] = (x * scale + shift).astype(o_ref.dtype)


# ---------------------------------------------------------------------------
# Streaming two-pass path (large activations).
# ---------------------------------------------------------------------------
def _row_stats_kernel(x_ref, sum_ref, ssq_ref, *, hw_total, t_hw):
    """Accumulate per-row sum and sum-of-squares (f32) across HW tiles."""
    hj = pl.program_id(1)
    x = x_ref[...].astype(jnp.float32)                    # (T_R, T_HW)

    # t_hw is chosen as a divisor of HW whenever possible, so this branch is
    # normally compiled out.  When active, the select is only a real mask on
    # the final HW tile (valid >= t_hw elsewhere).
    if hw_total % t_hw != 0:
        lane = jax.lax.broadcasted_iota(jnp.int32, x.shape, 1)
        valid = hw_total - hj * t_hw
        x = jnp.where(lane < valid, x, 0.0)

    psum = jnp.sum(x, axis=1, keepdims=True)              # (T_R, 1) XLU reduce
    pssq = jnp.sum(x * x, axis=1, keepdims=True)          # (T_R, 1)

    # NOTE: if nc % T_R != 0, the padded sublane rows of the last row block
    # reduce over uninitialized VMEM.  That garbage stays confined to output
    # rows that Pallas discards at writeback; never mix rows in this kernel.
    @pl.when(hj == 0)
    def _():
        sum_ref[...] = psum
        ssq_ref[...] = pssq

    @pl.when(hj != 0)
    def _():
        sum_ref[...] += psum
        ssq_ref[...] += pssq


def _normalize_kernel(x_ref, scale_ref, shift_ref, o_ref):
    """y = x * scale + shift, scale/shift broadcast from (T_R, 1) over lanes."""
    x = x_ref[...].astype(jnp.float32)                    # (T_R, T_HW)
    y = x * scale_ref[...] + shift_ref[...]
    o_ref[...] = y.astype(o_ref.dtype)


def quant_batch_norm(x_nchw, gamma, beta, eps=1e-5, *, force_tiled=False):
    """BatchNorm2d (training-mode batch stats) forward via Pallas TPU kernels.

    x_nchw: (N, C, H, W); gamma, beta: (C,).  Returns (N, C, H, W), input dtype.
    """
    n, c, h, w = x_nchw.shape
    hw = h * w
    nc = n * c
    m_count = n * hw                                      # elements per channel
    itemsize = x_nchw.dtype.itemsize

    # ---- Fused fast path: whole activation fits comfortably in VMEM --------
    # Budget the *padded* VMEM footprint (sublane 8 / lane 128) so shapes with
    # tiny trailing dims don't blow up; 4 MiB of f32 payload leaves ample
    # headroom under every generation's default scoped-VMEM limit with the
    # explicit 48 MiB request below (v7x physical is 64 MiB).
    padded_f32_bytes = n * _round_up(c, 8) * _round_up(hw, 128) * 4
    if (not force_tiled) and padded_f32_bytes <= (4 << 20):
        x3 = x_nchw.reshape(n, c, hw)                     # free view
        g3 = gamma.reshape(1, c, 1)
        b3 = beta.reshape(1, c, 1)
        y3 = pl.pallas_call(
            functools.partial(_fused_bn_kernel, eps=eps, inv_m=1.0 / m_count),
            out_shape=jax.ShapeDtypeStruct((n, c, hw), x_nchw.dtype),
            grid=(1,),
            in_specs=[pl.BlockSpec((n, c, hw), lambda i: (0, 0, 0)),
                      pl.BlockSpec((1, c, 1), lambda i: (0, 0, 0)),
                      pl.BlockSpec((1, c, 1), lambda i: (0, 0, 0))],
            out_specs=pl.BlockSpec((n, c, hw), lambda i: (0, 0, 0)),
            compiler_params=pltpu.CompilerParams(
                dimension_semantics=("arbitrary",),
                vmem_limit_bytes=48 * 1024 * 1024),
            cost_estimate=pl.CostEstimate(
                flops=7 * nc * hw, transcendentals=c,
                bytes_accessed=nc * hw * (itemsize + itemsize) + 2 * c * 4),
        )(x3, g3, b3)
        return y3.reshape(n, c, h, w)

    # ---- Streaming two-pass path -------------------------------------------
    # Free reshape (no data movement): row r = n*C + c holds x[n, c, :, :].
    x2d = x_nchw.reshape(nc, hw)

    # Lane-biased tiles: up to 512 x 1024 f32 (2 MiB per buffer).  Pass 2 holds
    # ~2 double-buffered streams of that size (~8-9 MiB) -> fits the default
    # scoped-VMEM limit on v5e (16 MiB), v6e and v7x (32 MiB) without raising it.
    t_r = nc if nc <= 512 else 512
    t_hw = _pick_lane_tile(hw, max_tile=1024, align=128)
    grid_r = pl.cdiv(nc, t_r)
    grid_hw = pl.cdiv(hw, t_hw)

    # v7x megacore: the stats pass's only "parallel" axis is the row axis; make
    # sure it has >= 2 blocks when possible so both TensorCores get work.
    # (No effect on single-TC v5e/v6e.)
    t_r_stats = t_r
    if pl.cdiv(nc, t_r_stats) < 2 and nc >= 16:
        t_r_stats = _round_up(pl.cdiv(nc, 2), 8)
    grid_r_stats = pl.cdiv(nc, t_r_stats)

    # ---- Pass 1: per-row sums / sums-of-squares (f32 accumulation) ----
    row_sum, row_ssq = pl.pallas_call(
        functools.partial(_row_stats_kernel, hw_total=hw, t_hw=t_hw),
        out_shape=(jax.ShapeDtypeStruct((nc, 1), jnp.float32),
                   jax.ShapeDtypeStruct((nc, 1), jnp.float32)),
        grid=(grid_r_stats, grid_hw),
        in_specs=[pl.BlockSpec((t_r_stats, t_hw), lambda i, j: (i, j))],
        out_specs=(pl.BlockSpec((t_r_stats, 1), lambda i, j: (i, 0)),
                   pl.BlockSpec((t_r_stats, 1), lambda i, j: (i, 0))),
        compiler_params=pltpu.CompilerParams(
            dimension_semantics=("parallel", "arbitrary")),
        cost_estimate=pl.CostEstimate(
            flops=3 * nc * hw, transcendentals=0,
            bytes_accessed=nc * hw * itemsize + 2 * nc * 4),
    )(x2d)

    # ---- Tiny O(N*C) per-channel combine + scale/shift precompute (XLA) ----
    # NOTE: E[x^2] - mean^2 in f32 can lose precision when |mean| >> std; the
    # fused path above uses a two-pass formulation.  Clamp guards against tiny
    # negative variance from rounding.
    ch_sum = row_sum.reshape(n, c).sum(axis=0)
    ch_ssq = row_ssq.reshape(n, c).sum(axis=0)
    mean = ch_sum / m_count
    var = jnp.maximum(ch_ssq / m_count - mean * mean, 0.0)   # biased variance
    inv = jax.lax.rsqrt(var + jnp.float32(eps))
    scale_c = gamma.astype(jnp.float32) * inv
    shift_c = beta.astype(jnp.float32) - mean * scale_c
    # Per-row (N*C,) versions: row r = n*C + c  ->  channel = r % C.
    scale_row = jnp.tile(scale_c, n).reshape(nc, 1)
    shift_row = jnp.tile(shift_c, n).reshape(nc, 1)

    # ---- Pass 2: streamed normalize, lane-dense output ----
    y2d = pl.pallas_call(
        _normalize_kernel,
        out_shape=jax.ShapeDtypeStruct((nc, hw), x_nchw.dtype),
        grid=(grid_r, grid_hw),
        in_specs=[pl.BlockSpec((t_r, t_hw), lambda i, j: (i, j)),
                  pl.BlockSpec((t_r, 1), lambda i, j: (i, 0)),
                  pl.BlockSpec((t_r, 1), lambda i, j: (i, 0))],
        out_specs=pl.BlockSpec((t_r, t_hw), lambda i, j: (i, j)),
        compiler_params=pltpu.CompilerParams(
            dimension_semantics=("parallel", "parallel")),
        cost_estimate=pl.CostEstimate(
            flops=2 * nc * hw, transcendentals=0,
            bytes_accessed=nc * hw * (2 * itemsize) + 2 * nc * 4),
    )(x2d, scale_row, shift_row)

    # Free reshape back to NCHW.
    return y2d.reshape(n, c, h, w)


def _reference_bn(x_nchw, gamma, beta, eps=1e-5):
    # Pure-JAX reference: torch.nn.BatchNorm2d forward, training mode.
    x = x_nchw.astype(jnp.float32)
    mean = jnp.mean(x, axis=(0, 2, 3), keepdims=True)
    var = jnp.mean((x - mean) ** 2, axis=(0, 2, 3), keepdims=True)
    g = gamma.reshape(1, -1, 1, 1)
    b = beta.reshape(1, -1, 1, 1)
    return ((x - mean) * jax.lax.rsqrt(var + eps) * g + b).astype(x_nchw.dtype)


def _check(y, y_ref, tag):
    assert y.shape == y_ref.shape, tag
    err = jnp.max(jnp.abs(y.astype(jnp.float32) - y_ref.astype(jnp.float32)))
    assert float(err) < 1e-4, f"{tag}: max abs err {float(err)}"


if __name__ == "__main__":
    eps = 1e-5
    key = jax.random.PRNGKey(0)
    kx, kg, kb, kx2, kx3 = jax.random.split(key, 5)

    # --- Primary test: small shape consistent with the module (C = 4) -------
    # Takes the fused single-call VMEM-resident path.
    N, C, H, W = 2, 4, 16, 16
    x = jax.random.normal(kx, (N, C, H, W), dtype=jnp.float32)
    gamma = 1.0 + 0.1 * jax.random.normal(kg, (C,), dtype=jnp.float32)
    beta = 0.1 * jax.random.normal(kb, (C,), dtype=jnp.float32)
    y = jax.block_until_ready(quant_batch_norm(x, gamma, beta, eps))
    _check(y, _reference_bn(x, gamma, beta, eps), "fused")

    # --- Streaming path, divisor lane tile (t_hw = 640 divides HW = 1280) ---
    x2 = jax.random.normal(kx2, (2, 4, 16, 80), dtype=jnp.float32)
    y2 = jax.block_until_ready(
        quant_batch_norm(x2, gamma, beta, eps, force_tiled=True))
    _check(y2, _reference_bn(x2, gamma, beta, eps), "tiled-divisor")

    # --- Streaming path, non-divisor lane tile (HW = 1040 -> masked last tile)
    x3 = jax.random.normal(kx3, (2, 4, 16, 65), dtype=jnp.float32)
    y3 = jax.block_until_ready(
        quant_batch_norm(x3, gamma, beta, eps, force_tiled=True))
    _check(y3, _reference_bn(x3, gamma, beta, eps), "tiled-masked")

    # TODO(synk): running_mean/running_var buffer updates and QuantTensor
    # wrapping are stateful / metadata-only; they do not affect forward values.
    print("KERNEL_OK")
</pallas_src>

<mosaic_0001>
module attributes {stable_mosaic.version = 11 : i64} {
  func.func @_fused_bn_kernel(%arg0: i32, %arg1: memref<2x4x256xf32, #tpu.memory_space<vmem>>, %arg2: memref<1x4x1xf32, #tpu.memory_space<vmem>>, %arg3: memref<1x4x1xf32, #tpu.memory_space<vmem>>, %arg4: memref<2x4x256xf32, #tpu.memory_space<vmem>>) attributes {dimension_semantics = [#tpu.dimension_semantics<arbitrary>], iteration_bounds = array<i64: 1>, scalar_prefetch = 0 : i64, scratch_operands = 0 : i64, tpu.core_type = #tpu.core_type<tc>, window_params = [{pipeline_mode = #tpu.pipeline_mode<synchronous>, transform_indices = @transform_0, window_bounds = array<i64: 2, 4, 256>}, {pipeline_mode = #tpu.pipeline_mode<synchronous>, transform_indices = @transform_1, window_bounds = array<i64: 1, 4, 1>}, {pipeline_mode = #tpu.pipeline_mode<synchronous>, transform_indices = @transform_2, window_bounds = array<i64: 1, 4, 1>}, {pipeline_mode = #tpu.pipeline_mode<synchronous>, transform_indices = @transform_3, window_bounds = array<i64: 2, 4, 256>}]} {
    %c0 = arith.constant 0 : index
    %c0_0 = arith.constant 0 : index
    %c0_1 = arith.constant 0 : index
    %0 = vector.load %arg1[%c0, %c0_0, %c0_1] : memref<2x4x256xf32, #tpu.memory_space<vmem>>, vector<2x4x256xf32>
    %cst = arith.constant dense<0.000000e+00> : vector<2x4xf32>
    %1 = vector.multi_reduction <add>, %0, %cst [2] : vector<2x4x256xf32> to vector<2x4xf32>
    %2 = vector.shape_cast %1 : vector<2x4xf32> to vector<2x4x1xf32>
    %cst_2 = arith.constant dense<0.000000e+00> : vector<4x1xf32>
    %3 = vector.multi_reduction <add>, %2, %cst_2 [0] : vector<2x4x1xf32> to vector<4x1xf32>
    %4 = vector.shape_cast %3 : vector<4x1xf32> to vector<1x4x1xf32>
    %cst_3 = arith.constant 0.001953125 : f32
    %5 = vector.broadcast %cst_3 : f32 to vector<1x4x1xf32>
    %6 = arith.mulf %4, %5 : vector<1x4x1xf32>
    %7 = vector.broadcast %6 : vector<1x4x1xf32> to vector<2x4x256xf32>
    %8 = arith.subf %0, %7 : vector<2x4x256xf32>
    %9 = arith.mulf %8, %8 : vector<2x4x256xf32>
    %cst_4 = arith.constant dense<0.000000e+00> : vector<2x4xf32>
    %10 = vector.multi_reduction <add>, %9, %cst_4 [2] : vector<2x4x256xf32> to vector<2x4xf32>
    %11 = vector.shape_cast %10 : vector<2x4xf32> to vector<2x4x1xf32>
    %cst_5 = arith.constant dense<0.000000e+00> : vector<4x1xf32>
    %12 = vector.multi_reduction <add>, %11, %cst_5 [0] : vector<2x4x1xf32> to vector<4x1xf32>
    %13 = vector.shape_cast %12 : vector<4x1xf32> to vector<1x4x1xf32>
    %cst_6 = arith.constant 0.001953125 : f32
    %14 = vector.broadcast %cst_6 : f32 to vector<1x4x1xf32>
    %15 = arith.mulf %13, %14 : vector<1x4x1xf32>
    %cst_7 = arith.constant 9.99999974E-6 : f32
    %16 = vector.broadcast %cst_7 : f32 to vector<1x4x1xf32>
    %17 = arith.addf %15, %16 : vector<1x4x1xf32>
    %18 = math.rsqrt %17 : vector<1x4x1xf32>
    %c0_8 = arith.constant 0 : index
    %c0_9 = arith.constant 0 : index
    %c0_10 = arith.constant 0 : index
    %19 = vector.load %arg2[%c0_8, %c0_9, %c0_10] : memref<1x4x1xf32, #tpu.memory_space<vmem>>, vector<1x4x1xf32>
    %20 = arith.mulf %19, %18 : vector<1x4x1xf32>
    %c0_11 = arith.constant 0 : index
    %c0_12 = arith.constant 0 : index
    %c0_13 = arith.constant 0 : index
    %21 = vector.load %arg3[%c0_11, %c0_12, %c0_13] : memref<1x4x1xf32, #tpu.memory_space<vmem>>, vector<1x4x1xf32>
    %22 = arith.mulf %6, %20 : vector<1x4x1xf32>
    %23 = arith.subf %21, %22 : vector<1x4x1xf32>
    %24 = vector.broadcast %20 : vector<1x4x1xf32> to vector<2x4x256xf32>
    %25 = arith.mulf %0, %24 : vector<2x4x256xf32>
    %26 = vector.broadcast %23 : vector<1x4x1xf32> to vector<2x4x256xf32>
    %27 = arith.addf %25, %26 : vector<2x4x256xf32>
    %c0_14 = arith.constant 0 : index
    %c0_15 = arith.constant 0 : index
    %c0_16 = arith.constant 0 : index
    %28 = vector.load %arg4[%c0_14, %c0_15, %c0_16] : memref<2x4x256xf32, #tpu.memory_space<vmem>>, vector<2x4x256xf32>
    tpu.vector_store %arg4[%c0_14, %c0_15, %c0_16], %27 {strides = array<i32>} : memref<2x4x256xf32, #tpu.memory_space<vmem>>, vector<2x4x256xf32>,
    return
  }
  func.func @transform_0(%arg0: i32) -> (i32, i32, i32) {
    %c0_i32 = arith.constant 0 : i32
    %c0_i32_0 = arith.constant 0 : i32
    %c0_i32_1 = arith.constant 0 : i32
    %c0_i32_2 = arith.constant 0 : i32
    return %c0_i32, %c0_i32_0, %c0_i32_1 : i32, i32, i32
  }
  func.func @transform_1(%arg0: i32) -> (i32, i32, i32) {
    %c0_i32 = arith.constant 0 : i32
    %c0_i32_0 = arith.constant 0 : i32
    %c0_i32_1 = arith.constant 0 : i32
    %c0_i32_2 = arith.constant 0 : i32
    return %c0_i32, %c0_i32_0, %c0_i32_1 : i32, i32, i32
  }
  func.func @transform_2(%arg0: i32) -> (i32, i32, i32) {
    %c0_i32 = arith.constant 0 : i32
    %c0_i32_0 = arith.constant 0 : i32
    %c0_i32_1 = arith.constant 0 : i32
    %c0_i32_2 = arith.constant 0 : i32
    return %c0_i32, %c0_i32_0, %c0_i32_1 : i32, i32, i32
  }
  func.func @transform_3(%arg0: i32) -> (i32, i32, i32) {
    %c0_i32 = arith.constant 0 : i32
    %c0_i32_0 = arith.constant 0 : i32
    %c0_i32_1 = arith.constant 0 : i32
    %c0_i32_2 = arith.constant 0 : i32
    return %c0_i32, %c0_i32_0, %c0_i32_1 : i32, i32, i32
  }
}

</mosaic_0001>

<llo_original>
// kernel: tpu_custom_call.1
$region0: #{tpu_custom_call.1}
  #allocation0 [shape = 'u32[]', space=smem, size = 0x4, offset = 0x4, fixed_abs, tag = 'smem constant byte address 0x4 - core index']
  #allocation1 [shape = 'u32[72,128]{1,0:T(1,128)}', space=vmem, size = 0x9000, scoped, tag = 'internal scratch']
  %s0 = inlined_call_operand.hbm [shape: f32[2,4,256], index: 0, kind: input, shape index: {}]
  %s1 = inlined_call_operand.vmem [shape: f32[1,4,1], index: 1, kind: input, shape index: {}]
  %s2 = inlined_call_operand.vmem [shape: f32[1,4,1], index: 2, kind: input, shape index: {}]
  %s3 = inlined_call_operand.hbm [shape: f32[2,4,256], index: 3, kind: output, shape index: {}]
  %s4 = sld [smem:[#allocation0]]
  $region26: #{tpu_custom_call.1} parent=0
    _
  %s6 = ssub.s32 1, %s4
  %s7 = scalar_select 0, %s6, %s4
  $region1: #{tpu_custom_call.1} parent=0
    #allocation2 [shape = 'u8[8192]{0}', space=vmem, size = 0x2000, scoped, tag = 'input window, operand 0, single buffered']
    #allocation3 [shape = 's32[1]{0}', space=sflag, size = 0x4, scoped, tag = 'scoped memory for tpu_custom_call.1']
    #allocation4 [shape = 's32[1]{0}', space=sflag, size = 0x4, scoped, tag = 'scoped memory for tpu_custom_call.1']
    #allocation5 [shape = 'u8[8192]{0}', space=vmem, size = 0x2000, scoped, tag = 'output window, operand 0, single buffered']
    %8 = vsyncpa [#allocation3], 0
    %9 = vsyncpa [#allocation4], 0
    // Predicated region
    $region2: #{tpu_custom_call.1} parent=1 // pred_check
      _
    $region3: #{tpu_custom_call.1} parent=1 // pred_check_branch
      %11 = sbr.rel (0) target = $region5
    $region4: #{tpu_custom_call.1} parent=1 // pred_region
      %13 = vsyncadd [#allocation3], 0
      %s14 = sshll.u32 %s0, 4
      %s15 = int_to_ptr.hbm [resolvable:$true] %s14
      %s16 = sshll.u32 [#allocation2], 4
      %s17 = int_to_ptr.vmem [resolvable:$true] %s16
      %22 = dma.hbm_to_vmem [thread:$0]  %s15, 256, %s17, [#allocation3], 128, 128, 8
    $region5: #{tpu_custom_call.1} parent=1 // pred_fallthru
      _
    // Predicated region
    $region6: #{tpu_custom_call.1} parent=1 // pred_check
      _
    $region7: #{tpu_custom_call.1} parent=1 // pred_check_branch
      %24 = sbr.rel (0) target = $region9
    $region8: #{tpu_custom_call.1} parent=1 // pred_region
      _
    $region9: #{tpu_custom_call.1} parent=1 // pred_fallthru
      _
    // Predicated region
    $region10: #{tpu_custom_call.1} parent=1 // pred_check
      _
    $region11: #{tpu_custom_call.1} parent=1 // pred_check_branch
      %26 = sbr.rel (0) target = $region13
    $region12: #{tpu_custom_call.1} parent=1 // pred_region
      _
    $region13: #{tpu_custom_call.1} parent=1 // pred_fallthru
      _
    // Predicated region
    $region14: #{tpu_custom_call.1} parent=1 // pred_check
      _
    $region15: #{tpu_custom_call.1} parent=1 // pred_check_branch
      %28 = sbr.rel (0) target = $region17
    $region16: #{tpu_custom_call.1} parent=1 // pred_region
      %30 = dma.done [#allocation3], 256
    $region17: #{tpu_custom_call.1} parent=1 // pred_fallthru
      _
    %v31 = vld [vmem:[#allocation2] sm:$0xff]
    %v32 = vld [vmem:[#allocation2 + $0x8] sm:$0xff]
    %35 = vst [vmem:[#allocation1] ss:$2 sm:$0xff] %v31
    %v36 = vld.sshfl [vmem:[#allocation1] sm:$0xff pattern:$0x75316420]
    %v37 = vld.sshfl [vmem:[#allocation1 + $0x8] sm:$0xff pattern:$0x75316420]
    %s38 = scalar_lea.vmem [#allocation1], 16
    %39 = vst [vmem:[%s38] ss:$2 sm:$0xff] %v32
    %v40 = vld.sshfl [vmem:[#allocation1 + $0x10] sm:$0xff pattern:$0x75316420]
    %v41 = vld.sshfl [vmem:[#allocation1 + $0x18] sm:$0xff pattern:$0x75316420]
    %vm46 = vcmask 1043456
    %v47 = vsel %vm46, %v36, 0.0
    %v48 = vsel %vm46, %v37, 0.0
    %v49 = vadd.f32 %v47, %v48
    %50 = vadd.xlane.f32.xlu0 %v49
    %v51 = vpop.xlane.xlu0 %50
    %v52 = vsel %vm46, %v40, 0.0
    %v53 = vsel %vm46, %v41, 0.0
    %v54 = vadd.f32 %v52, %v53
    %55 = vadd.xlane.f32.xlu0 %v54
    %v56 = vpop.xlane.xlu0 %55
    %v57 = vsel %vm46, %v51, 0.0
    %v58 = vsel %vm46, %v56, 0.0
    %v59 = vadd.f32 %v57, %v58
    %v60 = vmul.f32 %v59, 0.001953125
    %v63 = vunpack.c.l.s4 839922192
    %v64 = vunpack.c.0.s8 %v63
    %v65 = vperm.slane %v60, %v64
    %v67 = vsub.f32 %v31, %v65
    %v68 = vsub.f32 %v32, %v65
    %v69 = vmul.f32 %v67, %v67
    %v70 = vmul.f32 %v68, %v68
    %73 = vst [vmem:[#allocation1] ss:$2 sm:$0xff] %v69
    %v74 = vld.sshfl [vmem:[#allocation1] sm:$0xff pattern:$0x75316420]
    %v75 = vld.sshfl [vmem:[#allocation1 + $0x8] sm:$0xff pattern:$0x75316420]
    %s76 = scalar_lea.vmem [#allocation1], 16
    %77 = vst [vmem:[%s76] ss:$2 sm:$0xff] %v70
    %v78 = vld.sshfl [vmem:[#allocation1 + $0x10] sm:$0xff pattern:$0x75316420]
    %v79 = vld.sshfl [vmem:[#allocation1 + $0x18] sm:$0xff pattern:$0x75316420]
    %v84 = vsel %vm46, %v74, 0.0
    %v85 = vsel %vm46, %v75, 0.0
    %v86 = vadd.f32 %v84, %v85
    %87 = vadd.xlane.f32.xlu0 %v86
    %v88 = vpop.xlane.xlu0 %87
    %v89 = vsel %vm46, %v78, 0.0
    %v90 = vsel %vm46, %v79, 0.0
    %v91 = vadd.f32 %v89, %v90
    %92 = vadd.xlane.f32.xlu0 %v91
    %v93 = vpop.xlane.xlu0 %92
    %v94 = vsel %vm46, %v88, 0.0
    %v95 = vsel %vm46, %v93, 0.0
    %v96 = vadd.f32 %v94, %v95
    %v97 = vmul.f32 %v96, 0.001953125
    %v98 = vadd.f32 %v97, 1e-05
    %v99 = vrsqrt.pop %v98
    %v100 = vmul.f32 %v99, %v98
    %v101 = vmul.f32 %v100, %v99
    %v102 = vmul.f32 0.5, %v101
    %v103 = vsub.f32 1.5, %v102
    %v104 = vmul.f32 %v99, %v103
    %vm105 = vweird.f32 %v98
    %vm106 = vweird.f32 %v99
    %vm107 = vmor %vm105, %vm106
    %v108 = vsel %vm107, %v99, %v104
    %v109 = vld [vmem:[%s1] sm:$0xf]
    %v110 = vmul.f32 %v109, %v108
    %v111 = vld [vmem:[%s2] sm:$0xf]
    %v112 = vmul.f32 %v60, %v110
    %v113 = vsub.f32 %v111, %v112
    %115 = vset.pattern.permute.xlu0 0
    %116 = vperm.xlu0 %115, %v110
    %v117 = vpop.permute.xlu0 %116
    %v119 = vunpack.c.l.s4 839922192
    %v120 = vunpack.c.0.s8 %v119
    %v121 = vperm.slane %v117, %v120
    %v123 = vmul.f32 %v31, %v121
    %v124 = vmul.f32 %v32, %v121
    %126 = vset.pattern.permute.xlu0 0
    %127 = vperm.xlu0 %126, %v113
    %v128 = vpop.permute.xlu0 %127
    %v130 = vunpack.c.l.s4 839922192
    %v131 = vunpack.c.0.s8 %v130
    %v132 = vperm.slane %v128, %v131
    %v134 = vadd.f32 %v123, %v132
    %v135 = vadd.f32 %v124, %v132
    %136 = vst [vmem:[#allocation5] sm:$0xff] %v134
    %137 = vst [vmem:[#allocation5 + $0x8] sm:$0xff] %v135
    // Predicated region
    $region18: #{tpu_custom_call.1} parent=1 // pred_check
      _
    $region19: #{tpu_custom_call.1} parent=1 // pred_check_branch
      %139 = sbr.rel (0) target = $region21
    $region20: #{tpu_custom_call.1} parent=1 // pred_region
      %141 = vsyncadd [#allocation4], 0
      %s142 = sshll.u32 [#allocation5], 4
      %s143 = int_to_ptr.vmem [resolvable:$true] %s142
      %s144 = sshll.u32 %s3, 4
      %s145 = int_to_ptr.hbm [resolvable:$true] %s144
      %150 = dma.vmem_to_hbm [thread:$0]  %s143, 256, %s145, [#allocation4], 128, 128, 8
    $region21: #{tpu_custom_call.1} parent=1 // pred_fallthru
      _
    // Predicated region
    $region22: #{tpu_custom_call.1} parent=1 // pred_check
      _
    $region23: #{tpu_custom_call.1} parent=1 // pred_check_branch
      %152 = sbr.rel (0) target = $region25
    $region24: #{tpu_custom_call.1} parent=1 // pred_region
      %154 = dma.done [#allocation4], 256
    $region25: #{tpu_custom_call.1} parent=1 // pred_fallthru
      _
    %155 = vsyncpa [#allocation3], 1
    %156 = vsyncpa [#allocation4], 1

</llo_original>
